<compile_context>
chip_gen: v7x
topology: tpu7x:2x2x1
jax: 0.10.0
libtpu: 0.0.40
codegen_flags: <defaults>
</compile_context>

<pallas_src>
import jax
import jax.numpy as jnp
from jax.experimental import pallas as pl
from jax.experimental.pallas import tpu as pltpu

EPS = 1e-4      # matches nn.BatchNorm2d(eps=0.0001)
KS = 3          # kernel_size
PAD = 1         # padding (stride = 1)


def binblock_forward(x_nchw, gamma, beta, run_mean, run_var, w_oihw):
    """BinBlock forward (eval-mode BN -> 3x3 conv -> ReLU). NCHW in / NCHW out."""
    N, Cin, H, W = x_nchw.shape
    Cout = w_oihw.shape[0]
    Cp = ((Cin + 7) // 8) * 8        # channels padded to the f32 sublane tile (8)
    Hp, Wp = H + 2 * PAD, W + 2 * PAD
    HWp = H * Wp                     # computational ("wide") grid: H rows x Wp cols
    HW = H * W                       # valid output pixels per image
    K = KS * KS * Cp                 # im2col contraction size (72 for Cin->8)
    Lf = Hp * Wp + 2                 # flattened padded image + 1 guard element each side

    f32 = jnp.float32
    # ---- Fold BatchNorm (eval mode) into one exact affine on the activation --------
    scale = gamma.astype(f32) * jax.lax.rsqrt(run_var.astype(f32) + EPS)   # (Cin,)
    shift = beta.astype(f32) - run_mean.astype(f32) * scale                # (Cin,)
    xbn = (x_nchw.astype(f32) * scale[None, :, None, None]
           + shift[None, :, None, None])

    # Zero-pad: channels Cin->Cp (sublane alignment), spatial +PAD each side (the conv
    # halo applies to the BN output, so zeros are correct), flatten H,W, and add one
    # guard element per side so every conv tap (kh,kw) is a contiguous slice of length
    # H*Wp.  Under jit this is a single XLA producer fusion.
    xp = jnp.pad(xbn, ((0, 0), (0, Cp - Cin), (PAD, PAD), (PAD, PAD)))
    xg = jnp.pad(xp.reshape(N, Cp, Hp * Wp), ((0, 0), (0, 0), (1, 1)))     # (N,Cp,Lf)

    # im2col weight matrix (channel-padded): column k = (kh*KS + kw)*Cp + cin
    wpad = jnp.pad(w_oihw.astype(f32), ((0, 0), (0, Cp - Cin), (0, 0), (0, 0)))
    wmat = jnp.transpose(wpad, (0, 2, 3, 1)).reshape(Cout, K)              # (Cout,K)

    def kernel(x_ref, w_ref, o_ref, patch_ref):
        # x_ref    : (N, Cp, Lf)      BN-folded, zero-padded, flattened (+guards)
        # w_ref    : (Cout, K)        im2col weights
        # o_ref    : (N, Cout, HW)    NCHW-flattened output (lane-dense, HW = 256)
        # patch_ref: (K, N*HWp)       VMEM scratch for the batched im2col patch
        # Build the im2col patch: 9 contiguous lane-offset slices per image, each an
        # 8-sublane-aligned full-row write into the scratch.
        for n in range(N):
            for kh in range(KS):
                for kw in range(KS):
                    t = kh * KS + kw
                    s = kh * Wp + kw
                    patch_ref[t * Cp:(t + 1) * Cp, n * HWp:(n + 1) * HWp] = \
                        x_ref[n, :, s:s + HWp]
        # Single MXU matmul over the whole receptive field AND the whole batch.
        out_wide = jnp.dot(w_ref[...], patch_ref[...],
                           preferred_element_type=jnp.float32)      # (Cout, N*HWp)
        out_wide = jnp.maximum(out_wide, 0.0)                        # ReLU (elementwise)
        # Compact the H x Wp wide grid to the valid H x W columns with static lane
        # slices + row stores (no one-hot matmul, no DMA'd selection matrix); the
        # HBM writeback of o_ref stays fully lane-dense (last dim = 256 = 2x128).
        for n in range(N):
            for h in range(H):
                src = n * HWp + h * Wp + PAD
                o_ref[n, :, h * W:(h + 1) * W] = \
                    out_wide[:, src:src + W].astype(o_ref.dtype)

    cost = pl.CostEstimate(
        flops=2 * Cout * K * N * HWp,
        transcendentals=0,
        bytes_accessed=(N * Cp * Lf + Cout * K + N * Cout * HW) * 4,
    )

    out_flat = pl.pallas_call(
        kernel,
        out_shape=jax.ShapeDtypeStruct((N, Cout, HW), f32),
        grid=(1,),
        in_specs=[
            pl.BlockSpec((N, Cp, Lf), lambda i: (0, 0, 0)),
            pl.BlockSpec((Cout, K), lambda i: (0, 0)),
        ],
        out_specs=pl.BlockSpec((N, Cout, HW), lambda i: (0, 0, 0)),
        scratch_shapes=[pltpu.VMEM((K, N * HWp), jnp.float32)],
        compiler_params=pltpu.CompilerParams(
            dimension_semantics=("arbitrary",)),
        cost_estimate=cost,
    )(xg, wmat)

    # (N, Cout, H*W) -> (N, Cout, H, W): contiguous reshape, no transpose.
    return out_flat.reshape(N, Cout, H, W)


def binblock_reference(x_nchw, gamma, beta, run_mean, run_var, w_oihw):
    """Pure-JAX reference (eval-mode BN -> conv -> relu), NCHW."""
    inv_std = jax.lax.rsqrt(run_var + EPS)
    xbn = (x_nchw - run_mean[None, :, None, None]) * \
        (inv_std * gamma)[None, :, None, None] + beta[None, :, None, None]
    y = jax.lax.conv_general_dilated(
        xbn, w_oihw, window_strides=(1, 1), padding=((PAD, PAD), (PAD, PAD)),
        dimension_numbers=("NCHW", "OIHW", "NCHW"))
    return jnp.maximum(y, 0.0)


if __name__ == "__main__":
    # Shapes consistent with BinBlock(input_channels=4, output_channels=8,
    # kernel_size=3, stride=1, padding=1, batch_norm=True): N=2, Cin=4, H=W=16, Cout=8.
    N, Cin, H, W, Cout = 2, 4, 16, 16, 8

    key = jax.random.PRNGKey(0)
    k_x, k_w, k_g, k_b, k_m, k_v = jax.random.split(key, 6)

    x = jax.random.normal(k_x, (N, Cin, H, W), jnp.float32)
    w = jax.random.normal(k_w, (Cout, Cin, KS, KS), jnp.float32) * 0.1
    gamma = 1.0 + 0.1 * jax.random.normal(k_g, (Cin,), jnp.float32)
    beta = 0.1 * jax.random.normal(k_b, (Cin,), jnp.float32)
    run_mean = 0.1 * jax.random.normal(k_m, (Cin,), jnp.float32)
    run_var = 1.0 + 0.1 * jax.random.uniform(k_v, (Cin,), jnp.float32)

    fwd = jax.jit(binblock_forward)
    out = fwd(x, gamma, beta, run_mean, run_var, w)
    out = jax.block_until_ready(out)

    ref = binblock_reference(x, gamma, beta, run_mean, run_var, w)
    assert out.shape == (N, Cout, H, W)
    assert jnp.allclose(out, ref, atol=1e-4, rtol=1e-4), \
        f"max err {jnp.max(jnp.abs(out - ref))}"

    print("KERNEL_OK")
</pallas_src>

<mosaic_0001>
module attributes {stable_mosaic.version = 11 : i64} {
  func.func @kernel(%arg0: i32, %arg1: memref<2x8x326xf32, #tpu.memory_space<vmem>>, %arg2: memref<8x72xf32, #tpu.memory_space<vmem>>, %arg3: memref<2x8x256xf32, #tpu.memory_space<vmem>>, %arg4: memref<72x576xf32, #tpu.memory_space<vmem>>) attributes {dimension_semantics = [#tpu.dimension_semantics<arbitrary>], iteration_bounds = array<i64: 1>, scalar_prefetch = 0 : i64, scratch_operands = 1 : i64, tpu.core_type = #tpu.core_type<tc>, window_params = [{pipeline_mode = #tpu.pipeline_mode<synchronous>, transform_indices = @transform_0, window_bounds = array<i64: 2, 8, 326>}, {pipeline_mode = #tpu.pipeline_mode<synchronous>, transform_indices = @transform_1, window_bounds = array<i64: 8, 72>}, {pipeline_mode = #tpu.pipeline_mode<synchronous>, transform_indices = @transform_2, window_bounds = array<i64: 2, 8, 256>}]} {
    %c0 = arith.constant 0 : index
    %c0_0 = arith.constant 0 : index
    %c0_1 = arith.constant 0 : index
    %0 = vector.load %arg1[%c0, %c0_0, %c0_1] : memref<2x8x326xf32, #tpu.memory_space<vmem>>, vector<1x8x288xf32>
    %1 = vector.shape_cast %0 : vector<1x8x288xf32> to vector<8x288xf32>
    %c0_2 = arith.constant 0 : index
    %c0_3 = arith.constant 0 : index
    %2 = vector.load %arg4[%c0_2, %c0_3] : memref<72x576xf32, #tpu.memory_space<vmem>>, vector<8x288xf32>
    tpu.vector_store %arg4[%c0_2, %c0_3], %1 {strides = array<i32>} : memref<72x576xf32, #tpu.memory_space<vmem>>, vector<8x288xf32>,
    %c0_4 = arith.constant 0 : index
    %c0_5 = arith.constant 0 : index
    %c1 = arith.constant 1 : index
    %3 = vector.load %arg1[%c0_4, %c0_5, %c1] : memref<2x8x326xf32, #tpu.memory_space<vmem>>, vector<1x8x288xf32>
    %4 = vector.shape_cast %3 : vector<1x8x288xf32> to vector<8x288xf32>
    %c8 = arith.constant 8 : index
    %c0_6 = arith.constant 0 : index
    %5 = vector.load %arg4[%c8, %c0_6] : memref<72x576xf32, #tpu.memory_space<vmem>>, vector<8x288xf32>
    tpu.vector_store %arg4[%c8, %c0_6], %4 {strides = array<i32>} : memref<72x576xf32, #tpu.memory_space<vmem>>, vector<8x288xf32>,
    %c0_7 = arith.constant 0 : index
    %c0_8 = arith.constant 0 : index
    %c2 = arith.constant 2 : index
    %6 = vector.load %arg1[%c0_7, %c0_8, %c2] : memref<2x8x326xf32, #tpu.memory_space<vmem>>, vector<1x8x288xf32>
    %7 = vector.shape_cast %6 : vector<1x8x288xf32> to vector<8x288xf32>
    %c16 = arith.constant 16 : index
    %c0_9 = arith.constant 0 : index
    %8 = vector.load %arg4[%c16, %c0_9] : memref<72x576xf32, #tpu.memory_space<vmem>>, vector<8x288xf32>
    tpu.vector_store %arg4[%c16, %c0_9], %7 {strides = array<i32>} : memref<72x576xf32, #tpu.memory_space<vmem>>, vector<8x288xf32>,
    %c0_10 = arith.constant 0 : index
    %c0_11 = arith.constant 0 : index
    %c18 = arith.constant 18 : index
    %9 = vector.load %arg1[%c0_10, %c0_11, %c18] : memref<2x8x326xf32, #tpu.memory_space<vmem>>, vector<1x8x288xf32>
    %10 = vector.shape_cast %9 : vector<1x8x288xf32> to vector<8x288xf32>
    %c24 = arith.constant 24 : index
    %c0_12 = arith.constant 0 : index
    %11 = vector.load %arg4[%c24, %c0_12] : memref<72x576xf32, #tpu.memory_space<vmem>>, vector<8x288xf32>
    tpu.vector_store %arg4[%c24, %c0_12], %10 {strides = array<i32>} : memref<72x576xf32, #tpu.memory_space<vmem>>, vector<8x288xf32>,
    %c0_13 = arith.constant 0 : index
    %c0_14 = arith.constant 0 : index
    %c19 = arith.constant 19 : index
    %12 = vector.load %arg1[%c0_13, %c0_14, %c19] : memref<2x8x326xf32, #tpu.memory_space<vmem>>, vector<1x8x288xf32>
    %13 = vector.shape_cast %12 : vector<1x8x288xf32> to vector<8x288xf32>
    %c32 = arith.constant 32 : index
    %c0_15 = arith.constant 0 : index
    %14 = vector.load %arg4[%c32, %c0_15] : memref<72x576xf32, #tpu.memory_space<vmem>>, vector<8x288xf32>
    tpu.vector_store %arg4[%c32, %c0_15], %13 {strides = array<i32>} : memref<72x576xf32, #tpu.memory_space<vmem>>, vector<8x288xf32>,
    %c0_16 = arith.constant 0 : index
    %c0_17 = arith.constant 0 : index
    %c20 = arith.constant 20 : index
    %15 = vector.load %arg1[%c0_16, %c0_17, %c20] : memref<2x8x326xf32, #tpu.memory_space<vmem>>, vector<1x8x288xf32>
    %16 = vector.shape_cast %15 : vector<1x8x288xf32> to vector<8x288xf32>
    %c40 = arith.constant 40 : index
    %c0_18 = arith.constant 0 : index
    %17 = vector.load %arg4[%c40, %c0_18] : memref<72x576xf32, #tpu.memory_space<vmem>>, vector<8x288xf32>
    tpu.vector_store %arg4[%c40, %c0_18], %16 {strides = array<i32>} : memref<72x576xf32, #tpu.memory_space<vmem>>, vector<8x288xf32>,
    %c0_19 = arith.constant 0 : index
    %c0_20 = arith.constant 0 : index
    %c36 = arith.constant 36 : index
    %18 = vector.load %arg1[%c0_19, %c0_20, %c36] : memref<2x8x326xf32, #tpu.memory_space<vmem>>, vector<1x8x288xf32>
    %19 = vector.shape_cast %18 : vector<1x8x288xf32> to vector<8x288xf32>
    %c48 = arith.constant 48 : index
    %c0_21 = arith.constant 0 : index
    %20 = vector.load %arg4[%c48, %c0_21] : memref<72x576xf32, #tpu.memory_space<vmem>>, vector<8x288xf32>
    tpu.vector_store %arg4[%c48, %c0_21], %19 {strides = array<i32>} : memref<72x576xf32, #tpu.memory_space<vmem>>, vector<8x288xf32>,
    %c0_22 = arith.constant 0 : index
    %c0_23 = arith.constant 0 : index
    %c37 = arith.constant 37 : index
    %21 = vector.load %arg1[%c0_22, %c0_23, %c37] : memref<2x8x326xf32, #tpu.memory_space<vmem>>, vector<1x8x288xf32>
    %22 = vector.shape_cast %21 : vector<1x8x288xf32> to vector<8x288xf32>
    %c56 = arith.constant 56 : index
    %c0_24 = arith.constant 0 : index
    %23 = vector.load %arg4[%c56, %c0_24] : memref<72x576xf32, #tpu.memory_space<vmem>>, vector<8x288xf32>
    tpu.vector_store %arg4[%c56, %c0_24], %22 {strides = array<i32>} : memref<72x576xf32, #tpu.memory_space<vmem>>, vector<8x288xf32>,
    %c0_25 = arith.constant 0 : index
    %c0_26 = arith.constant 0 : index
    %c38 = arith.constant 38 : index
    %24 = vector.load %arg1[%c0_25, %c0_26, %c38] : memref<2x8x326xf32, #tpu.memory_space<vmem>>, vector<1x8x288xf32>
    %25 = vector.shape_cast %24 : vector<1x8x288xf32> to vector<8x288xf32>
    %c64 = arith.constant 64 : index
    %c0_27 = arith.constant 0 : index
    %26 = vector.load %arg4[%c64, %c0_27] : memref<72x576xf32, #tpu.memory_space<vmem>>, vector<8x288xf32>
    tpu.vector_store %arg4[%c64, %c0_27], %25 {strides = array<i32>} : memref<72x576xf32, #tpu.memory_space<vmem>>, vector<8x288xf32>,
    %c1_28 = arith.constant 1 : index
    %c0_29 = arith.constant 0 : index
    %c0_30 = arith.constant 0 : index
    %27 = vector.load %arg1[%c1_28, %c0_29, %c0_30] : memref<2x8x326xf32, #tpu.memory_space<vmem>>, vector<1x8x288xf32>
    %28 = vector.shape_cast %27 : vector<1x8x288xf32> to vector<8x288xf32>
    %c0_31 = arith.constant 0 : index
    %c288 = arith.constant 288 : index
    %29 = vector.load %arg4[%c0_31, %c288] : memref<72x576xf32, #tpu.memory_space<vmem>>, vector<8x288xf32>
    tpu.vector_store %arg4[%c0_31, %c288], %28 {strides = array<i32>} : memref<72x576xf32, #tpu.memory_space<vmem>>, vector<8x288xf32>,
    %c1_32 = arith.constant 1 : index
    %c0_33 = arith.constant 0 : index
    %c1_34 = arith.constant 1 : index
    %30 = vector.load %arg1[%c1_32, %c0_33, %c1_34] : memref<2x8x326xf32, #tpu.memory_space<vmem>>, vector<1x8x288xf32>
    %31 = vector.shape_cast %30 : vector<1x8x288xf32> to vector<8x288xf32>
    %c8_35 = arith.constant 8 : index
    %c288_36 = arith.constant 288 : index
    %32 = vector.load %arg4[%c8_35, %c288_36] : memref<72x576xf32, #tpu.memory_space<vmem>>, vector<8x288xf32>
    tpu.vector_store %arg4[%c8_35, %c288_36], %31 {strides = array<i32>} : memref<72x576xf32, #tpu.memory_space<vmem>>, vector<8x288xf32>,
    %c1_37 = arith.constant 1 : index
    %c0_38 = arith.constant 0 : index
    %c2_39 = arith.constant 2 : index
    %33 = vector.load %arg1[%c1_37, %c0_38, %c2_39] : memref<2x8x326xf32, #tpu.memory_space<vmem>>, vector<1x8x288xf32>
    %34 = vector.shape_cast %33 : vector<1x8x288xf32> to vector<8x288xf32>
    %c16_40 = arith.constant 16 : index
    %c288_41 = arith.constant 288 : index
    %35 = vector.load %arg4[%c16_40, %c288_41] : memref<72x576xf32, #tpu.memory_space<vmem>>, vector<8x288xf32>
    tpu.vector_store %arg4[%c16_40, %c288_41], %34 {strides = array<i32>} : memref<72x576xf32, #tpu.memory_space<vmem>>, vector<8x288xf32>,
    %c1_42 = arith.constant 1 : index
    %c0_43 = arith.constant 0 : index
    %c18_44 = arith.constant 18 : index
    %36 = vector.load %arg1[%c1_42, %c0_43, %c18_44] : memref<2x8x326xf32, #tpu.memory_space<vmem>>, vector<1x8x288xf32>
    %37 = vector.shape_cast %36 : vector<1x8x288xf32> to vector<8x288xf32>
    %c24_45 = arith.constant 24 : index
    %c288_46 = arith.constant 288 : index
    %38 = vector.load %arg4[%c24_45, %c288_46] : memref<72x576xf32, #tpu.memory_space<vmem>>, vector<8x288xf32>
    tpu.vector_store %arg4[%c24_45, %c288_46], %37 {strides = array<i32>} : memref<72x576xf32, #tpu.memory_space<vmem>>, vector<8x288xf32>,
    %c1_47 = arith.constant 1 : index
    %c0_48 = arith.constant 0 : index
    %c19_49 = arith.constant 19 : index
    %39 = vector.load %arg1[%c1_47, %c0_48, %c19_49] : memref<2x8x326xf32, #tpu.memory_space<vmem>>, vector<1x8x288xf32>
    %40 = vector.shape_cast %39 : vector<1x8x288xf32> to vector<8x288xf32>
    %c32_50 = arith.constant 32 : index
    %c288_51 = arith.constant 288 : index
    %41 = vector.load %arg4[%c32_50, %c288_51] : memref<72x576xf32, #tpu.memory_space<vmem>>, vector<8x288xf32>
    tpu.vector_store %arg4[%c32_50, %c288_51], %40 {strides = array<i32>} : memref<72x576xf32, #tpu.memory_space<vmem>>, vector<8x288xf32>,
    %c1_52 = arith.constant 1 : index
    %c0_53 = arith.constant 0 : index
    %c20_54 = arith.constant 20 : index
    %42 = vector.load %arg1[%c1_52, %c0_53, %c20_54] : memref<2x8x326xf32, #tpu.memory_space<vmem>>, vector<1x8x288xf32>
    %43 = vector.shape_cast %42 : vector<1x8x288xf32> to vector<8x288xf32>
    %c40_55 = arith.constant 40 : index
    %c288_56 = arith.constant 288 : index
    %44 = vector.load %arg4[%c40_55, %c288_56] : memref<72x576xf32, #tpu.memory_space<vmem>>, vector<8x288xf32>
    tpu.vector_store %arg4[%c40_55, %c288_56], %43 {strides = array<i32>} : memref<72x576xf32, #tpu.memory_space<vmem>>, vector<8x288xf32>,
    %c1_57 = arith.constant 1 : index
    %c0_58 = arith.constant 0 : index
    %c36_59 = arith.constant 36 : index
    %45 = vector.load %arg1[%c1_57, %c0_58, %c36_59] : memref<2x8x326xf32, #tpu.memory_space<vmem>>, vector<1x8x288xf32>
    %46 = vector.shape_cast %45 : vector<1x8x288xf32> to vector<8x288xf32>
    %c48_60 = arith.constant 48 : index
    %c288_61 = arith.constant 288 : index
    %47 = vector.load %arg4[%c48_60, %c288_61] : memref<72x576xf32, #tpu.memory_space<vmem>>, vector<8x288xf32>
    tpu.vector_store %arg4[%c48_60, %c288_61], %46 {strides = array<i32>} : memref<72x576xf32, #tpu.memory_space<vmem>>, vector<8x288xf32>,
    %c1_62 = arith.constant 1 : index
    %c0_63 = arith.constant 0 : index
    %c37_64 = arith.constant 37 : index
    %48 = vector.load %arg1[%c1_62, %c0_63, %c37_64] : memref<2x8x326xf32, #tpu.memory_space<vmem>>, vector<1x8x288xf32>
    %49 = vector.shape_cast %48 : vector<1x8x288xf32> to vector<8x288xf32>
    %c56_65 = arith.constant 56 : index
    %c288_66 = arith.constant 288 : index
    %50 = vector.load %arg4[%c56_65, %c288_66] : memref<72x576xf32, #tpu.memory_space<vmem>>, vector<8x288xf32>
    tpu.vector_store %arg4[%c56_65, %c288_66], %49 {strides = array<i32>} : memref<72x576xf32, #tpu.memory_space<vmem>>, vector<8x288xf32>,
    %c1_67 = arith.constant 1 : index
    %c0_68 = arith.constant 0 : index
    %c38_69 = arith.constant 38 : index
    %51 = vector.load %arg1[%c1_67, %c0_68, %c38_69] : memref<2x8x326xf32, #tpu.memory_space<vmem>>, vector<1x8x288xf32>
    %52 = vector.shape_cast %51 : vector<1x8x288xf32> to vector<8x288xf32>
    %c64_70 = arith.constant 64 : index
    %c288_71 = arith.constant 288 : index
    %53 = vector.load %arg4[%c64_70, %c288_71] : memref<72x576xf32, #tpu.memory_space<vmem>>, vector<8x288xf32>
    tpu.vector_store %arg4[%c64_70, %c288_71], %52 {strides = array<i32>} : memref<72x576xf32, #tpu.memory_space<vmem>>, vector<8x288xf32>,
    %c0_72 = arith.constant 0 : index
    %c0_73 = arith.constant 0 : index
    %54 = vector.load %arg2[%c0_72, %c0_73] : memref<8x72xf32, #tpu.memory_space<vmem>>, vector<8x72xf32>
    %c0_74 = arith.constant 0 : index
    %c0_75 = arith.constant 0 : index
    %55 = vector.load %arg4[%c0_74, %c0_75] : memref<72x576xf32, #tpu.memory_space<vmem>>, vector<72x576xf32>
    %cst = arith.constant dense<0.000000e+00> : vector<8x576xf32>
    %56 = tpu.matmul %54, %55, %cst {dimension_numbers = #tpu.dot_dimension_numbers<[1], [0], [0], [1], [0, 0, 1, 1], [], []>} : vector<8x72xf32>, vector<72x576xf32>, vector<8x576xf32> -> vector<8x576xf32>
    %cst_76 = arith.constant 0.000000e+00 : f32
    %57 = vector.broadcast %cst_76 : f32 to vector<8x576xf32>
    %58 = arith.maximumf %56, %57 : vector<8x576xf32>
    %59 = vector.extract_strided_slice %58 {offsets = [0, 1], sizes = [8, 16], strides = [1, 1]} : vector<8x576xf32> to vector<8x16xf32>
    %c0_77 = arith.constant 0 : index
    %c0_78 = arith.constant 0 : index
    %c0_79 = arith.constant 0 : index
    %60 = vector.load %arg3[%c0_77, %c0_78, %c0_79] : memref<2x8x256xf32, #tpu.memory_space<vmem>>, vector<1x8x16xf32>
    %61 = vector.shape_cast %60 : vector<1x8x16xf32> to vector<8x16xf32>
    %62 = vector.shape_cast %59 : vector<8x16xf32> to vector<1x8x16xf32>
    tpu.vector_store %arg3[%c0_77, %c0_78, %c0_79], %62 {strides = array<i32>} : memref<2x8x256xf32, #tpu.memory_space<vmem>>, vector<1x8x16xf32>,
    %63 = vector.extract_strided_slice %58 {offsets = [0, 19], sizes = [8, 16], strides = [1, 1]} : vector<8x576xf32> to vector<8x16xf32>
    %c0_80 = arith.constant 0 : index
    %c0_81 = arith.constant 0 : index
    %c16_82 = arith.constant 16 : index
    %64 = vector.load %arg3[%c0_80, %c0_81, %c16_82] : memref<2x8x256xf32, #tpu.memory_space<vmem>>, vector<1x8x16xf32>
    %65 = vector.shape_cast %64 : vector<1x8x16xf32> to vector<8x16xf32>
    %66 = vector.shape_cast %63 : vector<8x16xf32> to vector<1x8x16xf32>
    tpu.vector_store %arg3[%c0_80, %c0_81, %c16_82], %66 {strides = array<i32>} : memref<2x8x256xf32, #tpu.memory_space<vmem>>, vector<1x8x16xf32>,
    %67 = vector.extract_strided_slice %58 {offsets = [0, 37], sizes = [8, 16], strides = [1, 1]} : vector<8x576xf32> to vector<8x16xf32>
    %c0_83 = arith.constant 0 : index
    %c0_84 = arith.constant 0 : index
    %c32_85 = arith.constant 32 : index
    %68 = vector.load %arg3[%c0_83, %c0_84, %c32_85] : memref<2x8x256xf32, #tpu.memory_space<vmem>>, vector<1x8x16xf32>
    %69 = vector.shape_cast %68 : vector<1x8x16xf32> to vector<8x16xf32>
    %70 = vector.shape_cast %67 : vector<8x16xf32> to vector<1x8x16xf32>
    tpu.vector_store %arg3[%c0_83, %c0_84, %c32_85], %70 {strides = array<i32>} : memref<2x8x256xf32, #tpu.memory_space<vmem>>, vector<1x8x16xf32>,
    %71 = vector.extract_strided_slice %58 {offsets = [0, 55], sizes = [8, 16], strides = [1, 1]} : vector<8x576xf32> to vector<8x16xf32>
    %c0_86 = arith.constant 0 : index
    %c0_87 = arith.constant 0 : index
    %c48_88 = arith.constant 48 : index
    %72 = vector.load %arg3[%c0_86, %c0_87, %c48_88] : memref<2x8x256xf32, #tpu.memory_space<vmem>>, vector<1x8x16xf32>
    %73 = vector.shape_cast %72 : vector<1x8x16xf32> to vector<8x16xf32>
    %74 = vector.shape_cast %71 : vector<8x16xf32> to vector<1x8x16xf32>
    tpu.vector_store %arg3[%c0_86, %c0_87, %c48_88], %74 {strides = array<i32>} : memref<2x8x256xf32, #tpu.memory_space<vmem>>, vector<1x8x16xf32>,
    %75 = vector.extract_strided_slice %58 {offsets = [0, 73], sizes = [8, 16], strides = [1, 1]} : vector<8x576xf32> to vector<8x16xf32>
    %c0_89 = arith.constant 0 : index
    %c0_90 = arith.constant 0 : index
    %c64_91 = arith.constant 64 : index
    %76 = vector.load %arg3[%c0_89, %c0_90, %c64_91] : memref<2x8x256xf32, #tpu.memory_space<vmem>>, vector<1x8x16xf32>
    %77 = vector.shape_cast %76 : vector<1x8x16xf32> to vector<8x16xf32>
    %78 = vector.shape_cast %75 : vector<8x16xf32> to vector<1x8x16xf32>
    tpu.vector_store %arg3[%c0_89, %c0_90, %c64_91], %78 {strides = array<i32>} : memref<2x8x256xf32, #tpu.memory_space<vmem>>, vector<1x8x16xf32>,
    %79 = vector.extract_strided_slice %58 {offsets = [0, 91], sizes = [8, 16], strides = [1, 1]} : vector<8x576xf32> to vector<8x16xf32>
    %c0_92 = arith.constant 0 : index
    %c0_93 = arith.constant 0 : index
    %c80 = arith.constant 80 : index
    %80 = vector.load %arg3[%c0_92, %c0_93, %c80] : memref<2x8x256xf32, #tpu.memory_space<vmem>>, vector<1x8x16xf32>
    %81 = vector.shape_cast %80 : vector<1x8x16xf32> to vector<8x16xf32>
    %82 = vector.shape_cast %79 : vector<8x16xf32> to vector<1x8x16xf32>
    tpu.vector_store %arg3[%c0_92, %c0_93, %c80], %82 {strides = array<i32>} : memref<2x8x256xf32, #tpu.memory_space<vmem>>, vector<1x8x16xf32>,
    %83 = vector.extract_strided_slice %58 {offsets = [0, 109], sizes = [8, 16], strides = [1, 1]} : vector<8x576xf32> to vector<8x16xf32>
    %c0_94 = arith.constant 0 : index
    %c0_95 = arith.constant 0 : index
    %c96 = arith.constant 96 : index
    %84 = vector.load %arg3[%c0_94, %c0_95, %c96] : memref<2x8x256xf32, #tpu.memory_space<vmem>>, vector<1x8x16xf32>
    %85 = vector.shape_cast %84 : vector<1x8x16xf32> to vector<8x16xf32>
    %86 = vector.shape_cast %83 : vector<8x16xf32> to vector<1x8x16xf32>
    tpu.vector_store %arg3[%c0_94, %c0_95, %c96], %86 {strides = array<i32>} : memref<2x8x256xf32, #tpu.memory_space<vmem>>, vector<1x8x16xf32>,
    %87 = vector.extract_strided_slice %58 {offsets = [0, 127], sizes = [8, 16], strides = [1, 1]} : vector<8x576xf32> to vector<8x16xf32>
    %c0_96 = arith.constant 0 : index
    %c0_97 = arith.constant 0 : index
    %c112 = arith.constant 112 : index
    %88 = vector.load %arg3[%c0_96, %c0_97, %c112] : memref<2x8x256xf32, #tpu.memory_space<vmem>>, vector<1x8x16xf32>
    %89 = vector.shape_cast %88 : vector<1x8x16xf32> to vector<8x16xf32>
    %90 = vector.shape_cast %87 : vector<8x16xf32> to vector<1x8x16xf32>
    tpu.vector_store %arg3[%c0_96, %c0_97, %c112], %90 {strides = array<i32>} : memref<2x8x256xf32, #tpu.memory_space<vmem>>, vector<1x8x16xf32>,
    %91 = vector.extract_strided_slice %58 {offsets = [0, 145], sizes = [8, 16], strides = [1, 1]} : vector<8x576xf32> to vector<8x16xf32>
    %c0_98 = arith.constant 0 : index
    %c0_99 = arith.constant 0 : index
    %c128 = arith.constant 128 : index
    %92 = vector.load %arg3[%c0_98, %c0_99, %c128] : memref<2x8x256xf32, #tpu.memory_space<vmem>>, vector<1x8x16xf32>
    %93 = vector.shape_cast %92 : vector<1x8x16xf32> to vector<8x16xf32>
    %94 = vector.shape_cast %91 : vector<8x16xf32> to vector<1x8x16xf32>
    tpu.vector_store %arg3[%c0_98, %c0_99, %c128], %94 {strides = array<i32>} : memref<2x8x256xf32, #tpu.memory_space<vmem>>, vector<1x8x16xf32>,
    %95 = vector.extract_strided_slice %58 {offsets = [0, 163], sizes = [8, 16], strides = [1, 1]} : vector<8x576xf32> to vector<8x16xf32>
    %c0_100 = arith.constant 0 : index
    %c0_101 = arith.constant 0 : index
    %c144 = arith.constant 144 : index
    %96 = vector.load %arg3[%c0_100, %c0_101, %c144] : memref<2x8x256xf32, #tpu.memory_space<vmem>>, vector<1x8x16xf32>
    %97 = vector.shape_cast %96 : vector<1x8x16xf32> to vector<8x16xf32>
    %98 = vector.shape_cast %95 : vector<8x16xf32> to vector<1x8x16xf32>
    tpu.vector_store %arg3[%c0_100, %c0_101, %c144], %98 {strides = array<i32>} : memref<2x8x256xf32, #tpu.memory_space<vmem>>, vector<1x8x16xf32>,
    %99 = vector.extract_strided_slice %58 {offsets = [0, 181], sizes = [8, 16], strides = [1, 1]} : vector<8x576xf32> to vector<8x16xf32>
    %c0_102 = arith.constant 0 : index
    %c0_103 = arith.constant 0 : index
    %c160 = arith.constant 160 : index
    %100 = vector.load %arg3[%c0_102, %c0_103, %c160] : memref<2x8x256xf32, #tpu.memory_space<vmem>>, vector<1x8x16xf32>
    %101 = vector.shape_cast %100 : vector<1x8x16xf32> to vector<8x16xf32>
    %102 = vector.shape_cast %99 : vector<8x16xf32> to vector<1x8x16xf32>
    tpu.vector_store %arg3[%c0_102, %c0_103, %c160], %102 {strides = array<i32>} : memref<2x8x256xf32, #tpu.memory_space<vmem>>, vector<1x8x16xf32>,
    %103 = vector.extract_strided_slice %58 {offsets = [0, 199], sizes = [8, 16], strides = [1, 1]} : vector<8x576xf32> to vector<8x16xf32>
    %c0_104 = arith.constant 0 : index
    %c0_105 = arith.constant 0 : index
    %c176 = arith.constant 176 : index
    %104 = vector.load %arg3[%c0_104, %c0_105, %c176] : memref<2x8x256xf32, #tpu.memory_space<vmem>>, vector<1x8x16xf32>
    %105 = vector.shape_cast %104 : vector<1x8x16xf32> to vector<8x16xf32>
    %106 = vector.shape_cast %103 : vector<8x16xf32> to vector<1x8x16xf32>
    tpu.vector_store %arg3[%c0_104, %c0_105, %c176], %106 {strides = array<i32>} : memref<2x8x256xf32, #tpu.memory_space<vmem>>, vector<1x8x16xf32>,
    %107 = vector.extract_strided_slice %58 {offsets = [0, 217], sizes = [8, 16], strides = [1, 1]} : vector<8x576xf32> to vector<8x16xf32>
    %c0_106 = arith.constant 0 : index
    %c0_107 = arith.constant 0 : index
    %c192 = arith.constant 192 : index
    %108 = vector.load %arg3[%c0_106, %c0_107, %c192] : memref<2x8x256xf32, #tpu.memory_space<vmem>>, vector<1x8x16xf32>
    %109 = vector.shape_cast %108 : vector<1x8x16xf32> to vector<8x16xf32>
    %110 = vector.shape_cast %107 : vector<8x16xf32> to vector<1x8x16xf32>
    tpu.vector_store %arg3[%c0_106, %c0_107, %c192], %110 {strides = array<i32>} : memref<2x8x256xf32, #tpu.memory_space<vmem>>, vector<1x8x16xf32>,
    %111 = vector.extract_strided_slice %58 {offsets = [0, 235], sizes = [8, 16], strides = [1, 1]} : vector<8x576xf32> to vector<8x16xf32>
    %c0_108 = arith.constant 0 : index
    %c0_109 = arith.constant 0 : index
    %c208 = arith.constant 208 : index
    %112 = vector.load %arg3[%c0_108, %c0_109, %c208] : memref<2x8x256xf32, #tpu.memory_space<vmem>>, vector<1x8x16xf32>
    %113 = vector.shape_cast %112 : vector<1x8x16xf32> to vector<8x16xf32>
    %114 = vector.shape_cast %111 : vector<8x16xf32> to vector<1x8x16xf32>
    tpu.vector_store %arg3[%c0_108, %c0_109, %c208], %114 {strides = array<i32>} : memref<2x8x256xf32, #tpu.memory_space<vmem>>, vector<1x8x16xf32>,
    %115 = vector.extract_strided_slice %58 {offsets = [0, 253], sizes = [8, 16], strides = [1, 1]} : vector<8x576xf32> to vector<8x16xf32>
    %c0_110 = arith.constant 0 : index
    %c0_111 = arith.constant 0 : index
    %c224 = arith.constant 224 : index
    %116 = vector.load %arg3[%c0_110, %c0_111, %c224] : memref<2x8x256xf32, #tpu.memory_space<vmem>>, vector<1x8x16xf32>
    %117 = vector.shape_cast %116 : vector<1x8x16xf32> to vector<8x16xf32>
    %118 = vector.shape_cast %115 : vector<8x16xf32> to vector<1x8x16xf32>
    tpu.vector_store %arg3[%c0_110, %c0_111, %c224], %118 {strides = array<i32>} : memref<2x8x256xf32, #tpu.memory_space<vmem>>, vector<1x8x16xf32>,
    %119 = vector.extract_strided_slice %58 {offsets = [0, 271], sizes = [8, 16], strides = [1, 1]} : vector<8x576xf32> to vector<8x16xf32>
    %c0_112 = arith.constant 0 : index
    %c0_113 = arith.constant 0 : index
    %c240 = arith.constant 240 : index
    %120 = vector.load %arg3[%c0_112, %c0_113, %c240] : memref<2x8x256xf32, #tpu.memory_space<vmem>>, vector<1x8x16xf32>
    %121 = vector.shape_cast %120 : vector<1x8x16xf32> to vector<8x16xf32>
    %122 = vector.shape_cast %119 : vector<8x16xf32> to vector<1x8x16xf32>
    tpu.vector_store %arg3[%c0_112, %c0_113, %c240], %122 {strides = array<i32>} : memref<2x8x256xf32, #tpu.memory_space<vmem>>, vector<1x8x16xf32>,
    %123 = vector.extract_strided_slice %58 {offsets = [0, 289], sizes = [8, 16], strides = [1, 1]} : vector<8x576xf32> to vector<8x16xf32>
    %c1_114 = arith.constant 1 : index
    %c0_115 = arith.constant 0 : index
    %c0_116 = arith.constant 0 : index
    %124 = vector.load %arg3[%c1_114, %c0_115, %c0_116] : memref<2x8x256xf32, #tpu.memory_space<vmem>>, vector<1x8x16xf32>
    %125 = vector.shape_cast %124 : vector<1x8x16xf32> to vector<8x16xf32>
    %126 = vector.shape_cast %123 : vector<8x16xf32> to vector<1x8x16xf32>
    tpu.vector_store %arg3[%c1_114, %c0_115, %c0_116], %126 {strides = array<i32>} : memref<2x8x256xf32, #tpu.memory_space<vmem>>, vector<1x8x16xf32>,
    %127 = vector.extract_strided_slice %58 {offsets = [0, 307], sizes = [8, 16], strides = [1, 1]} : vector<8x576xf32> to vector<8x16xf32>
    %c1_117 = arith.constant 1 : index
    %c0_118 = arith.constant 0 : index
    %c16_119 = arith.constant 16 : index
    %128 = vector.load %arg3[%c1_117, %c0_118, %c16_119] : memref<2x8x256xf32, #tpu.memory_space<vmem>>, vector<1x8x16xf32>
    %129 = vector.shape_cast %128 : vector<1x8x16xf32> to vector<8x16xf32>
    %130 = vector.shape_cast %127 : vector<8x16xf32> to vector<1x8x16xf32>
    tpu.vector_store %arg3[%c1_117, %c0_118, %c16_119], %130 {strides = array<i32>} : memref<2x8x256xf32, #tpu.memory_space<vmem>>, vector<1x8x16xf32>,
    %131 = vector.extract_strided_slice %58 {offsets = [0, 325], sizes = [8, 16], strides = [1, 1]} : vector<8x576xf32> to vector<8x16xf32>
    %c1_120 = arith.constant 1 : index
    %c0_121 = arith.constant 0 : index
    %c32_122 = arith.constant 32 : index
    %132 = vector.load %arg3[%c1_120, %c0_121, %c32_122] : memref<2x8x256xf32, #tpu.memory_space<vmem>>, vector<1x8x16xf32>
    %133 = vector.shape_cast %132 : vector<1x8x16xf32> to vector<8x16xf32>
    %134 = vector.shape_cast %131 : vector<8x16xf32> to vector<1x8x16xf32>
    tpu.vector_store %arg3[%c1_120, %c0_121, %c32_122], %134 {strides = array<i32>} : memref<2x8x256xf32, #tpu.memory_space<vmem>>, vector<1x8x16xf32>,
    %135 = vector.extract_strided_slice %58 {offsets = [0, 343], sizes = [8, 16], strides = [1, 1]} : vector<8x576xf32> to vector<8x16xf32>
    %c1_123 = arith.constant 1 : index
    %c0_124 = arith.constant 0 : index
    %c48_125 = arith.constant 48 : index
    %136 = vector.load %arg3[%c1_123, %c0_124, %c48_125] : memref<2x8x256xf32, #tpu.memory_space<vmem>>, vector<1x8x16xf32>
    %137 = vector.shape_cast %136 : vector<1x8x16xf32> to vector<8x16xf32>
    %138 = vector.shape_cast %135 : vector<8x16xf32> to vector<1x8x16xf32>
    tpu.vector_store %arg3[%c1_123, %c0_124, %c48_125], %138 {strides = array<i32>} : memref<2x8x256xf32, #tpu.memory_space<vmem>>, vector<1x8x16xf32>,
    %139 = vector.extract_strided_slice %58 {offsets = [0, 361], sizes = [8, 16], strides = [1, 1]} : vector<8x576xf32> to vector<8x16xf32>
    %c1_126 = arith.constant 1 : index
    %c0_127 = arith.constant 0 : index
    %c64_128 = arith.constant 64 : index
    %140 = vector.load %arg3[%c1_126, %c0_127, %c64_128] : memref<2x8x256xf32, #tpu.memory_space<vmem>>, vector<1x8x16xf32>
    %141 = vector.shape_cast %140 : vector<1x8x16xf32> to vector<8x16xf32>
    %142 = vector.shape_cast %139 : vector<8x16xf32> to vector<1x8x16xf32>
    tpu.vector_store %arg3[%c1_126, %c0_127, %c64_128], %142 {strides = array<i32>} : memref<2x8x256xf32, #tpu.memory_space<vmem>>, vector<1x8x16xf32>,
    %143 = vector.extract_strided_slice %58 {offsets = [0, 379], sizes = [8, 16], strides = [1, 1]} : vector<8x576xf32> to vector<8x16xf32>
    %c1_129 = arith.constant 1 : index
    %c0_130 = arith.constant 0 : index
    %c80_131 = arith.constant 80 : index
    %144 = vector.load %arg3[%c1_129, %c0_130, %c80_131] : memref<2x8x256xf32, #tpu.memory_space<vmem>>, vector<1x8x16xf32>
    %145 = vector.shape_cast %144 : vector<1x8x16xf32> to vector<8x16xf32>
    %146 = vector.shape_cast %143 : vector<8x16xf32> to vector<1x8x16xf32>
    tpu.vector_store %arg3[%c1_129, %c0_130, %c80_131], %146 {strides = array<i32>} : memref<2x8x256xf32, #tpu.memory_space<vmem>>, vector<1x8x16xf32>,
    %147 = vector.extract_strided_slice %58 {offsets = [0, 397], sizes = [8, 16], strides = [1, 1]} : vector<8x576xf32> to vector<8x16xf32>
    %c1_132 = arith.constant 1 : index
    %c0_133 = arith.constant 0 : index
    %c96_134 = arith.constant 96 : index
    %148 = vector.load %arg3[%c1_132, %c0_133, %c96_134] : memref<2x8x256xf32, #tpu.memory_space<vmem>>, vector<1x8x16xf32>
    %149 = vector.shape_cast %148 : vector<1x8x16xf32> to vector<8x16xf32>
    %150 = vector.shape_cast %147 : vector<8x16xf32> to vector<1x8x16xf32>
    tpu.vector_store %arg3[%c1_132, %c0_133, %c96_134], %150 {strides = array<i32>} : memref<2x8x256xf32, #tpu.memory_space<vmem>>, vector<1x8x16xf32>,
    %151 = vector.extract_strided_slice %58 {offsets = [0, 415], sizes = [8, 16], strides = [1, 1]} : vector<8x576xf32> to vector<8x16xf32>
    %c1_135 = arith.constant 1 : index
    %c0_136 = arith.constant 0 : index
    %c112_137 = arith.constant 112 : index
    %152 = vector.load %arg3[%c1_135, %c0_136, %c112_137] : memref<2x8x256xf32, #tpu.memory_space<vmem>>, vector<1x8x16xf32>
    %153 = vector.shape_cast %152 : vector<1x8x16xf32> to vector<8x16xf32>
    %154 = vector.shape_cast %151 : vector<8x16xf32> to vector<1x8x16xf32>
    tpu.vector_store %arg3[%c1_135, %c0_136, %c112_137], %154 {strides = array<i32>} : memref<2x8x256xf32, #tpu.memory_space<vmem>>, vector<1x8x16xf32>,
    %155 = vector.extract_strided_slice %58 {offsets = [0, 433], sizes = [8, 16], strides = [1, 1]} : vector<8x576xf32> to vector<8x16xf32>
    %c1_138 = arith.constant 1 : index
    %c0_139 = arith.constant 0 : index
    %c128_140 = arith.constant 128 : index
    %156 = vector.load %arg3[%c1_138, %c0_139, %c128_140] : memref<2x8x256xf32, #tpu.memory_space<vmem>>, vector<1x8x16xf32>
    %157 = vector.shape_cast %156 : vector<1x8x16xf32> to vector<8x16xf32>
    %158 = vector.shape_cast %155 : vector<8x16xf32> to vector<1x8x16xf32>
    tpu.vector_store %arg3[%c1_138, %c0_139, %c128_140], %158 {strides = array<i32>} : memref<2x8x256xf32, #tpu.memory_space<vmem>>, vector<1x8x16xf32>,
    %159 = vector.extract_strided_slice %58 {offsets = [0, 451], sizes = [8, 16], strides = [1, 1]} : vector<8x576xf32> to vector<8x16xf32>
    %c1_141 = arith.constant 1 : index
    %c0_142 = arith.constant 0 : index
    %c144_143 = arith.constant 144 : index
    %160 = vector.load %arg3[%c1_141, %c0_142, %c144_143] : memref<2x8x256xf32, #tpu.memory_space<vmem>>, vector<1x8x16xf32>
    %161 = vector.shape_cast %160 : vector<1x8x16xf32> to vector<8x16xf32>
    %162 = vector.shape_cast %159 : vector<8x16xf32> to vector<1x8x16xf32>
    tpu.vector_store %arg3[%c1_141, %c0_142, %c144_143], %162 {strides = array<i32>} : memref<2x8x256xf32, #tpu.memory_space<vmem>>, vector<1x8x16xf32>,
    %163 = vector.extract_strided_slice %58 {offsets = [0, 469], sizes = [8, 16], strides = [1, 1]} : vector<8x576xf32> to vector<8x16xf32>
    %c1_144 = arith.constant 1 : index
    %c0_145 = arith.constant 0 : index
    %c160_146 = arith.constant 160 : index
    %164 = vector.load %arg3[%c1_144, %c0_145, %c160_146] : memref<2x8x256xf32, #tpu.memory_space<vmem>>, vector<1x8x16xf32>
    %165 = vector.shape_cast %164 : vector<1x8x16xf32> to vector<8x16xf32>
    %166 = vector.shape_cast %163 : vector<8x16xf32> to vector<1x8x16xf32>
    tpu.vector_store %arg3[%c1_144, %c0_145, %c160_146], %166 {strides = array<i32>} : memref<2x8x256xf32, #tpu.memory_space<vmem>>, vector<1x8x16xf32>,
    %167 = vector.extract_strided_slice %58 {offsets = [0, 487], sizes = [8, 16], strides = [1, 1]} : vector<8x576xf32> to vector<8x16xf32>
    %c1_147 = arith.constant 1 : index
    %c0_148 = arith.constant 0 : index
    %c176_149 = arith.constant 176 : index
    %168 = vector.load %arg3[%c1_147, %c0_148, %c176_149] : memref<2x8x256xf32, #tpu.memory_space<vmem>>, vector<1x8x16xf32>
    %169 = vector.shape_cast %168 : vector<1x8x16xf32> to vector<8x16xf32>
    %170 = vector.shape_cast %167 : vector<8x16xf32> to vector<1x8x16xf32>
    tpu.vector_store %arg3[%c1_147, %c0_148, %c176_149], %170 {strides = array<i32>} : memref<2x8x256xf32, #tpu.memory_space<vmem>>, vector<1x8x16xf32>,
    %171 = vector.extract_strided_slice %58 {offsets = [0, 505], sizes = [8, 16], strides = [1, 1]} : vector<8x576xf32> to vector<8x16xf32>
    %c1_150 = arith.constant 1 : index
    %c0_151 = arith.constant 0 : index
    %c192_152 = arith.constant 192 : index
    %172 = vector.load %arg3[%c1_150, %c0_151, %c192_152] : memref<2x8x256xf32, #tpu.memory_space<vmem>>, vector<1x8x16xf32>
    %173 = vector.shape_cast %172 : vector<1x8x16xf32> to vector<8x16xf32>
    %174 = vector.shape_cast %171 : vector<8x16xf32> to vector<1x8x16xf32>
    tpu.vector_store %arg3[%c1_150, %c0_151, %c192_152], %174 {strides = array<i32>} : memref<2x8x256xf32, #tpu.memory_space<vmem>>, vector<1x8x16xf32>,
    %175 = vector.extract_strided_slice %58 {offsets = [0, 523], sizes = [8, 16], strides = [1, 1]} : vector<8x576xf32> to vector<8x16xf32>
    %c1_153 = arith.constant 1 : index
    %c0_154 = arith.constant 0 : index
    %c208_155 = arith.constant 208 : index
    %176 = vector.load %arg3[%c1_153, %c0_154, %c208_155] : memref<2x8x256xf32, #tpu.memory_space<vmem>>, vector<1x8x16xf32>
    %177 = vector.shape_cast %176 : vector<1x8x16xf32> to vector<8x16xf32>
    %178 = vector.shape_cast %175 : vector<8x16xf32> to vector<1x8x16xf32>
    tpu.vector_store %arg3[%c1_153, %c0_154, %c208_155], %178 {strides = array<i32>} : memref<2x8x256xf32, #tpu.memory_space<vmem>>, vector<1x8x16xf32>,
    %179 = vector.extract_strided_slice %58 {offsets = [0, 541], sizes = [8, 16], strides = [1, 1]} : vector<8x576xf32> to vector<8x16xf32>
    %c1_156 = arith.constant 1 : index
    %c0_157 = arith.constant 0 : index
    %c224_158 = arith.constant 224 : index
    %180 = vector.load %arg3[%c1_156, %c0_157, %c224_158] : memref<2x8x256xf32, #tpu.memory_space<vmem>>, vector<1x8x16xf32>
    %181 = vector.shape_cast %180 : vector<1x8x16xf32> to vector<8x16xf32>
    %182 = vector.shape_cast %179 : vector<8x16xf32> to vector<1x8x16xf32>
    tpu.vector_store %arg3[%c1_156, %c0_157, %c224_158], %182 {strides = array<i32>} : memref<2x8x256xf32, #tpu.memory_space<vmem>>, vector<1x8x16xf32>,
    %183 = vector.extract_strided_slice %58 {offsets = [0, 559], sizes = [8, 16], strides = [1, 1]} : vector<8x576xf32> to vector<8x16xf32>
    %c1_159 = arith.constant 1 : index
    %c0_160 = arith.constant 0 : index
    %c240_161 = arith.constant 240 : index
    %184 = vector.load %arg3[%c1_159, %c0_160, %c240_161] : memref<2x8x256xf32, #tpu.memory_space<vmem>>, vector<1x8x16xf32>
    %185 = vector.shape_cast %184 : vector<1x8x16xf32> to vector<8x16xf32>
    %186 = vector.shape_cast %183 : vector<8x16xf32> to vector<1x8x16xf32>
    tpu.vector_store %arg3[%c1_159, %c0_160, %c240_161], %186 {strides = array<i32>} : memref<2x8x256xf32, #tpu.memory_space<vmem>>, vector<1x8x16xf32>,
    return
  }
  func.func @transform_0(%arg0: i32) -> (i32, i32, i32) {
    %c0_i32 = arith.constant 0 : i32
    %c0_i32_0 = arith.constant 0 : i32
    %c0_i32_1 = arith.constant 0 : i32
    %c0_i32_2 = arith.constant 0 : i32
    return %c0_i32, %c0_i32_0, %c0_i32_1 : i32, i32, i32
  }
  func.func @transform_1(%arg0: i32) -> (i32, i32) {
    %c0_i32 = arith.constant 0 : i32
    %c0_i32_0 = arith.constant 0 : i32
    %c0_i32_1 = arith.constant 0 : i32
    return %c0_i32, %c0_i32_0 : i32, i32
  }
  func.func @transform_2(%arg0: i32) -> (i32, i32, i32) {
    %c0_i32 = arith.constant 0 : i32
    %c0_i32_0 = arith.constant 0 : i32
    %c0_i32_1 = arith.constant 0 : i32
    %c0_i32_2 = arith.constant 0 : i32
    return %c0_i32, %c0_i32_0, %c0_i32_1 : i32, i32, i32
  }
}

</mosaic_0001>

<llo_original>
// kernel: binblock_forward.1
$region0: #{binblock_forward.1}
  #allocation0 [shape = 'u32[]', space=smem, size = 0x4, offset = 0x4, fixed_abs, tag = 'smem constant byte address 0x4 - core index']
  #allocation1 [shape = 'u32[144,128]{1,0:T(1,128)}', space=vmem, size = 0x12000, scoped, tag = 'internal scratch']
  #allocation2 [shape = 'f32[72,576]{1,0:T(8,128)}', space=vmem, size = 0x2d000, scoped, tag = 'scratch operand']
  %s0 = inlined_call_operand.vmem [shape: f32[2,8,326], index: 0, kind: input, shape index: {}]
  %s1 = inlined_call_operand.vmem [shape: f32[8,72], index: 1, kind: input, shape index: {}]
  %s2 = inlined_call_operand.vmem [shape: f32[2,8,256], index: 2, kind: output, shape index: {}]
  %s3 = sld [smem:[#allocation0]]
  $region18: #{binblock_forward.1} parent=0
    _
  %s5 = ssub.s32 1, %s3
  %s6 = scalar_select 0, %s5, %s3
  // Predicated region
  $region2: #{binblock_forward.1} parent=0 // pred_check
    _
  $region3: #{binblock_forward.1} parent=0 // pred_check_branch
    %8 = sbr.rel (0) target = $region5
  $region4: #{binblock_forward.1} parent=0 // pred_region
    _
  $region5: #{binblock_forward.1} parent=0 // pred_fallthru
    _
  // Predicated region
  $region6: #{binblock_forward.1} parent=0 // pred_check
    _
  $region7: #{binblock_forward.1} parent=0 // pred_check_branch
    %10 = sbr.rel (0) target = $region9
  $region8: #{binblock_forward.1} parent=0 // pred_region
    _
  $region9: #{binblock_forward.1} parent=0 // pred_fallthru
    _
  %v11 = vld [vmem:[%s0] sm:$0xff]
  %v12 = vld [vmem:[%s0 + $0x8] sm:$0xff]
  %v13 = vld [vmem:[%s0 + $0x10] sm:$0xff]
  %14 = vst [vmem:[#allocation2] sm:$0xff] %v11
  %15 = vst [vmem:[#allocation2 + $0x8] sm:$0xff] %v12
  %vm16 = vcmask 261120
  %17 = vst.msk [vmem:[#allocation2 + $0x10] sm:$0xff] %vm16, %v13
  %v18 = vld [vmem:[%s0] sm:$0xff]
  %v19 = vld [vmem:[%s0 + $0x8] sm:$0xff]
  %v20 = vld [vmem:[%s0 + $0x10] sm:$0xff]
  %24 = vrot.lane.b32.xlu0 %v18, 127
  %v25 = vpop.permute.xlu0 %24
  %26 = vrot.lane.b32.xlu0 %v19, 127
  %v27 = vpop.permute.xlu0 %26
  %28 = vrot.lane.b32.xlu0 %v20, 127
  %v29 = vpop.permute.xlu0 %28
  %vm30 = vcmask 1039360
  %v31 = vsel %vm30, %v25, %v27
  %v32 = vsel %vm30, %v27, %v29
  %36 = vst [vmem:[#allocation2 + $0x28] sm:$0xff] %v31
  %37 = vst [vmem:[#allocation2 + $0x30] sm:$0xff] %v32
  %38 = vst.msk [vmem:[#allocation2 + $0x38] sm:$0xff] %vm16, %v29
  %v39 = vld [vmem:[%s0] sm:$0xff]
  %v40 = vld [vmem:[%s0 + $0x8] sm:$0xff]
  %v41 = vld [vmem:[%s0 + $0x10] sm:$0xff]
  %45 = vrot.lane.b32.xlu0 %v39, 126
  %v46 = vpop.permute.xlu0 %45
  %47 = vrot.lane.b32.xlu0 %v40, 126
  %v48 = vpop.permute.xlu0 %47
  %49 = vrot.lane.b32.xlu0 %v41, 126
  %v50 = vpop.permute.xlu0 %49
  %vm51 = vcmask 1031168
  %v52 = vsel %vm51, %v46, %v48
  %v53 = vsel %vm51, %v48, %v50
  %57 = vst [vmem:[#allocation2 + $0x50] sm:$0xff] %v52
  %58 = vst [vmem:[#allocation2 + $0x58] sm:$0xff] %v53
  %59 = vst.msk [vmem:[#allocation2 + $0x60] sm:$0xff] %vm16, %v50
  %v60 = vld [vmem:[%s0] sm:$0xff]
  %v61 = vld [vmem:[%s0 + $0x8] sm:$0xff]
  %v62 = vld [vmem:[%s0 + $0x10] sm:$0xff]
  %66 = vrot.lane.b32.xlu0 %v60, 110
  %v67 = vpop.permute.xlu0 %66
  %68 = vrot.lane.b32.xlu0 %v61, 110
  %v69 = vpop.permute.xlu0 %68
  %70 = vrot.lane.b32.xlu0 %v62, 110
  %v71 = vpop.permute.xlu0 %70
  %vm72 = vcmask 900096
  %v73 = vsel %vm72, %v67, %v69
  %v74 = vsel %vm72, %v69, %v71
  %78 = vst [vmem:[#allocation2 + $0x78] sm:$0xff] %v73
  %79 = vst [vmem:[#allocation2 + $0x80] sm:$0xff] %v74
  %80 = vst.msk [vmem:[#allocation2 + $0x88] sm:$0xff] %vm16, %v71
  %v81 = vld [vmem:[%s0] sm:$0xff]
  %v82 = vld [vmem:[%s0 + $0x8] sm:$0xff]
  %v83 = vld [vmem:[%s0 + $0x10] sm:$0xff]
  %87 = vrot.lane.b32.xlu0 %v81, 109
  %v88 = vpop.permute.xlu0 %87
  %89 = vrot.lane.b32.xlu0 %v82, 109
  %v90 = vpop.permute.xlu0 %89
  %91 = vrot.lane.b32.xlu0 %v83, 109
  %v92 = vpop.permute.xlu0 %91
  %vm93 = vcmask 891904
  %v94 = vsel %vm93, %v88, %v90
  %v95 = vsel %vm93, %v90, %v92
  %99 = vst [vmem:[#allocation2 + $0xa0] sm:$0xff] %v94
  %100 = vst [vmem:[#allocation2 + $0xa8] sm:$0xff] %v95
  %101 = vst.msk [vmem:[#allocation2 + $0xb0] sm:$0xff] %vm16, %v92
  %v102 = vld [vmem:[%s0] sm:$0xff]
  %v103 = vld [vmem:[%s0 + $0x8] sm:$0xff]
  %v104 = vld [vmem:[%s0 + $0x10] sm:$0xff]
  %108 = vrot.lane.b32.xlu0 %v102, 108
  %v109 = vpop.permute.xlu0 %108
  %110 = vrot.lane.b32.xlu0 %v103, 108
  %v111 = vpop.permute.xlu0 %110
  %112 = vrot.lane.b32.xlu0 %v104, 108
  %v113 = vpop.permute.xlu0 %112
  %vm114 = vcmask 883712
  %v115 = vsel %vm114, %v109, %v111
  %v116 = vsel %vm114, %v111, %v113
  %120 = vst [vmem:[#allocation2 + $0xc8] sm:$0xff] %v115
  %121 = vst [vmem:[#allocation2 + $0xd0] sm:$0xff] %v116
  %122 = vst.msk [vmem:[#allocation2 + $0xd8] sm:$0xff] %vm16, %v113
  %v123 = vld [vmem:[%s0] sm:$0xff]
  %v124 = vld [vmem:[%s0 + $0x8] sm:$0xff]
  %v125 = vld [vmem:[%s0 + $0x10] sm:$0xff]
  %129 = vrot.lane.b32.xlu0 %v123, 92
  %v130 = vpop.permute.xlu0 %129
  %131 = vrot.lane.b32.xlu0 %v124, 92
  %v132 = vpop.permute.xlu0 %131
  %133 = vrot.lane.b32.xlu0 %v125, 92
  %v134 = vpop.permute.xlu0 %133
  %vm135 = vcmask 752640
  %v136 = vsel %vm135, %v130, %v132
  %v137 = vsel %vm135, %v132, %v134
  %141 = vst [vmem:[#allocation2 + $0xf0] sm:$0xff] %v136
  %142 = vst [vmem:[#allocation2 + $0xf8] sm:$0xff] %v137
  %143 = vst.msk [vmem:[#allocation2 + $0x100] sm:$0xff] %vm16, %v134
  %v144 = vld [vmem:[%s0] sm:$0xff]
  %v145 = vld [vmem:[%s0 + $0x8] sm:$0xff]
  %v146 = vld [vmem:[%s0 + $0x10] sm:$0xff]
  %150 = vrot.lane.b32.xlu0 %v144, 91
  %v151 = vpop.permute.xlu0 %150
  %152 = vrot.lane.b32.xlu0 %v145, 91
  %v153 = vpop.permute.xlu0 %152
  %154 = vrot.lane.b32.xlu0 %v146, 91
  %v155 = vpop.permute.xlu0 %154
  %vm156 = vcmask 744448
  %v157 = vsel %vm156, %v151, %v153
  %v158 = vsel %vm156, %v153, %v155
  %162 = vst [vmem:[#allocation2 + $0x118] sm:$0xff] %v157
  %163 = vst [vmem:[#allocation2 + $0x120] sm:$0xff] %v158
  %164 = vst.msk [vmem:[#allocation2 + $0x128] sm:$0xff] %vm16, %v155
  %v165 = vld [vmem:[%s0] sm:$0xff]
  %v166 = vld [vmem:[%s0 + $0x8] sm:$0xff]
  %v167 = vld [vmem:[%s0 + $0x10] sm:$0xff]
  %171 = vrot.lane.b32.xlu0 %v165, 90
  %v172 = vpop.permute.xlu0 %171
  %173 = vrot.lane.b32.xlu0 %v166, 90
  %v174 = vpop.permute.xlu0 %173
  %175 = vrot.lane.b32.xlu0 %v167, 90
  %v176 = vpop.permute.xlu0 %175
  %vm177 = vcmask 736256
  %v178 = vsel %vm177, %v172, %v174
  %v179 = vsel %vm177, %v174, %v176
  %183 = vst [vmem:[#allocation2 + $0x140] sm:$0xff] %v178
  %184 = vst [vmem:[#allocation2 + $0x148] sm:$0xff] %v179
  %185 = vst.msk [vmem:[#allocation2 + $0x150] sm:$0xff] %vm16, %v176
  %s186 = scalar_lea.vmem %s0, 24
  %v187 = vld [vmem:[%s186] sm:$0xff]
  %v188 = vld [vmem:[%s186 + $0x8] sm:$0xff]
  %v189 = vld [vmem:[%s186 + $0x10] sm:$0xff]
  %193 = vrot.lane.b32.xlu0 %v187, 32
  %v194 = vpop.permute.xlu0 %193
  %195 = vrot.lane.b32.xlu0 %v188, 32
  %v196 = vpop.permute.xlu0 %195
  %197 = vrot.lane.b32.xlu0 %v189, 32
  %v198 = vpop.permute.xlu0 %197
  %v199 = vsel %vm16, %v194, %v196
  %v200 = vsel %vm16, %v196, %v198
  %vm204 = vcmask 1047808
  %205 = vst.msk [vmem:[#allocation2 + $0x10] sm:$0xff] %vm204, %v194
  %206 = vst [vmem:[#allocation2 + $0x18] sm:$0xff] %v199
  %vm207 = vcmask 523264
  %208 = vst.msk [vmem:[#allocation2 + $0x20] sm:$0xff] %vm207, %v200
  %v209 = vld [vmem:[%s186] sm:$0xff]
  %v210 = vld [vmem:[%s186 + $0x8] sm:$0xff]
  %v211 = vld [vmem:[%s186 + $0x10] sm:$0xff]
  %215 = vrot.lane.b32.xlu0 %v209, 31
  %v216 = vpop.permute.xlu0 %215
  %217 = vrot.lane.b32.xlu0 %v210, 31
  %v218 = vpop.permute.xlu0 %217
  %219 = vrot.lane.b32.xlu0 %v211, 31
  %v220 = vpop.permute.xlu0 %219
  %vm221 = vcmask 252928
  %v222 = vsel %vm221, %v216, %v218
  %v223 = vsel %vm221, %v218, %v220
  %227 = vst.msk [vmem:[#allocation2 + $0x38] sm:$0xff] %vm204, %v216
  %228 = vst [vmem:[#allocation2 + $0x40] sm:$0xff] %v222
  %229 = vst.msk [vmem:[#allocation2 + $0x48] sm:$0xff] %vm207, %v223
  %v230 = vld [vmem:[%s186] sm:$0xff]
  %v231 = vld [vmem:[%s186 + $0x8] sm:$0xff]
  %v232 = vld [vmem:[%s186 + $0x10] sm:$0xff]
  %236 = vrot.lane.b32.xlu0 %v230, 30
  %v237 = vpop.permute.xlu0 %236
  %238 = vrot.lane.b32.xlu0 %v231, 30
  %v239 = vpop.permute.xlu0 %238
  %240 = vrot.lane.b32.xlu0 %v232, 30
  %v241 = vpop.permute.xlu0 %240
  %vm242 = vcmask 244736
  %v243 = vsel %vm242, %v237, %v239
  %v244 = vsel %vm242, %v239, %v241
  %248 = vst.msk [vmem:[#allocation2 + $0x60] sm:$0xff] %vm204, %v237
  %249 = vst [vmem:[#allocation2 + $0x68] sm:$0xff] %v243
  %250 = vst.msk [vmem:[#allocation2 + $0x70] sm:$0xff] %vm207, %v244
  %v251 = vld [vmem:[%s186] sm:$0xff]
  %v252 = vld [vmem:[%s186 + $0x8] sm:$0xff]
  %v253 = vld [vmem:[%s186 + $0x10] sm:$0xff]
  %257 = vrot.lane.b32.xlu0 %v251, 14
  %v258 = vpop.permute.xlu0 %257
  %259 = vrot.lane.b32.xlu0 %v252, 14
  %v260 = vpop.permute.xlu0 %259
  %261 = vrot.lane.b32.xlu0 %v253, 14
  %v262 = vpop.permute.xlu0 %261
  %vm263 = vcmask 113664
  %v264 = vsel %vm263, %v258, %v260
  %v265 = vsel %vm263, %v260, %v262
  %269 = vst.msk [vmem:[#allocation2 + $0x88] sm:$0xff] %vm204, %v258
  %270 = vst [vmem:[#allocation2 + $0x90] sm:$0xff] %v264
  %271 = vst.msk [vmem:[#allocation2 + $0x98] sm:$0xff] %vm207, %v265
  %v272 = vld [vmem:[%s186] sm:$0xff]
  %v273 = vld [vmem:[%s186 + $0x8] sm:$0xff]
  %v274 = vld [vmem:[%s186 + $0x10] sm:$0xff]
  %278 = vrot.lane.b32.xlu0 %v272, 13
  %v279 = vpop.permute.xlu0 %278
  %280 = vrot.lane.b32.xlu0 %v273, 13
  %v281 = vpop.permute.xlu0 %280
  %282 = vrot.lane.b32.xlu0 %v274, 13
  %v283 = vpop.permute.xlu0 %282
  %vm284 = vcmask 105472
  %v285 = vsel %vm284, %v279, %v281
  %v286 = vsel %vm284, %v281, %v283
  %290 = vst.msk [vmem:[#allocation2 + $0xb0] sm:$0xff] %vm204, %v279
  %291 = vst [vmem:[#allocation2 + $0xb8] sm:$0xff] %v285
  %292 = vst.msk [vmem:[#allocation2 + $0xc0] sm:$0xff] %vm207, %v286
  %v293 = vld [vmem:[%s186] sm:$0xff]
  %v294 = vld [vmem:[%s186 + $0x8] sm:$0xff]
  %v295 = vld [vmem:[%s186 + $0x10] sm:$0xff]
  %299 = vrot.lane.b32.xlu0 %v293, 12
  %v300 = vpop.permute.xlu0 %299
  %301 = vrot.lane.b32.xlu0 %v294, 12
  %v302 = vpop.permute.xlu0 %301
  %303 = vrot.lane.b32.xlu0 %v295, 12
  %v304 = vpop.permute.xlu0 %303
  %vm305 = vcmask 97280
  %v306 = vsel %vm305, %v300, %v302
  %v307 = vsel %vm305, %v302, %v304
  %311 = vst.msk [vmem:[#allocation2 + $0xd8] sm:$0xff] %vm204, %v300
  %312 = vst [vmem:[#allocation2 + $0xe0] sm:$0xff] %v306
  %313 = vst.msk [vmem:[#allocation2 + $0xe8] sm:$0xff] %vm207, %v307
  %v314 = vld [vmem:[%s186] sm:$0xff]
  %v315 = vld [vmem:[%s186 + $0x8] sm:$0xff]
  %v316 = vld [vmem:[%s186 + $0x10] sm:$0xff]
  %320 = vrot.lane.b32.xlu0 %v314, 124
  %v321 = vpop.permute.xlu0 %320
  %322 = vrot.lane.b32.xlu0 %v315, 124
  %v323 = vpop.permute.xlu0 %322
  %324 = vrot.lane.b32.xlu0 %v316, 124
  %v325 = vpop.permute.xlu0 %324
  %vm326 = vcmask 1014784
  %v327 = vsel %vm326, %v321, %v323
  %v328 = vsel %vm326, %v323, %v325
  %332 = vst.msk [vmem:[#allocation2 + $0x100] sm:$0xff] %vm204, %v327
  %333 = vst [vmem:[#allocation2 + $0x108] sm:$0xff] %v328
  %334 = vst.msk [vmem:[#allocation2 + $0x110] sm:$0xff] %vm207, %v325
  %v335 = vld [vmem:[%s186] sm:$0xff]
  %v336 = vld [vmem:[%s186 + $0x8] sm:$0xff]
  %v337 = vld [vmem:[%s186 + $0x10] sm:$0xff]
  %341 = vrot.lane.b32.xlu0 %v335, 123
  %v342 = vpop.permute.xlu0 %341
  %343 = vrot.lane.b32.xlu0 %v336, 123
  %v344 = vpop.permute.xlu0 %343
  %345 = vrot.lane.b32.xlu0 %v337, 123
  %v346 = vpop.permute.xlu0 %345
  %vm347 = vcmask 1006592
  %v348 = vsel %vm347, %v342, %v344
  %v349 = vsel %vm347, %v344, %v346
  %353 = vst.msk [vmem:[#allocation2 + $0x128] sm:$0xff] %vm204, %v348
  %354 = vst [vmem:[#allocation2 + $0x130] sm:$0xff] %v349
  %355 = vst.msk [vmem:[#allocation2 + $0x138] sm:$0xff] %vm207, %v346
  %v356 = vld [vmem:[%s186] sm:$0xff]
  %v357 = vld [vmem:[%s186 + $0x8] sm:$0xff]
  %v358 = vld [vmem:[%s186 + $0x10] sm:$0xff]
  %362 = vrot.lane.b32.xlu0 %v356, 122
  %v363 = vpop.permute.xlu0 %362
  %364 = vrot.lane.b32.xlu0 %v357, 122
  %v365 = vpop.permute.xlu0 %364
  %366 = vrot.lane.b32.xlu0 %v358, 122
  %v367 = vpop.permute.xlu0 %366
  %vm368 = vcmask 998400
  %v369 = vsel %vm368, %v363, %v365
  %v370 = vsel %vm368, %v365, %v367
  %374 = vst.msk [vmem:[#allocation2 + $0x150] sm:$0xff] %vm204, %v369
  %375 = vst [vmem:[#allocation2 + $0x158] sm:$0xff] %v370
  %376 = vst.msk [vmem:[#allocation2 + $0x160] sm:$0xff] %vm207, %v367
  %v377 = vld [vmem:[%s1] sm:$0xff]
  %v378 = vld [vmem:[#allocation2] sm:$0xff]
  %v379 = vld [vmem:[#allocation2 + $0x8] sm:$0xff]
  %v380 = vld [vmem:[#allocation2 + $0x10] sm:$0xff]
  %v381 = vld [vmem:[#allocation2 + $0x18] sm:$0xff]
  %v382 = vld [vmem:[#allocation2 + $0x20] sm:$0xff]
  %v383 = vld [vmem:[#allocation2 + $0x28] sm:$0xff]
  %v384 = vld [vmem:[#allocation2 + $0x30] sm:$0xff]
  %v385 = vld [vmem:[#allocation2 + $0x38] sm:$0xff]
  %v386 = vld [vmem:[#allocation2 + $0x40] sm:$0xff]
  %v387 = vld [vmem:[#allocation2 + $0x48] sm:$0xff]
  %v388 = vld [vmem:[#allocation2 + $0x50] sm:$0xff]
  %v389 = vld [vmem:[#allocation2 + $0x58] sm:$0xff]
  %v390 = vld [vmem:[#allocation2 + $0x60] sm:$0xff]
  %v391 = vld [vmem:[#allocation2 + $0x68] sm:$0xff]
  %v392 = vld [vmem:[#allocation2 + $0x70] sm:$0xff]
  %v393 = vld [vmem:[#allocation2 + $0x78] sm:$0xff]
  %v394 = vld [vmem:[#allocation2 + $0x80] sm:$0xff]
  %v395 = vld [vmem:[#allocation2 + $0x88] sm:$0xff]
  %v396 = vld [vmem:[#allocation2 + $0x90] sm:$0xff]
  %v397 = vld [vmem:[#allocation2 + $0x98] sm:$0xff]
  %v398 = vld [vmem:[#allocation2 + $0xa0] sm:$0xff]
  %v399 = vld [vmem:[#allocation2 + $0xa8] sm:$0xff]
  %v400 = vld [vmem:[#allocation2 + $0xb0] sm:$0xff]
  %v401 = vld [vmem:[#allocation2 + $0xb8] sm:$0xff]
  %v402 = vld [vmem:[#allocation2 + $0xc0] sm:$0xff]
  %v403 = vld [vmem:[#allocation2 + $0xc8] sm:$0xff]
  %v404 = vld [vmem:[#allocation2 + $0xd0] sm:$0xff]
  %v405 = vld [vmem:[#allocation2 + $0xd8] sm:$0xff]
  %v406 = vld [vmem:[#allocation2 + $0xe0] sm:$0xff]
  %v407 = vld [vmem:[#allocation2 + $0xe8] sm:$0xff]
  %v408 = vld [vmem:[#allocation2 + $0xf0] sm:$0xff]
  %v409 = vld [vmem:[#allocation2 + $0xf8] sm:$0xff]
  %v410 = vld [vmem:[#allocation2 + $0x100] sm:$0xff]
  %v411 = vld [vmem:[#allocation2 + $0x108] sm:$0xff]
  %v412 = vld [vmem:[#allocation2 + $0x110] sm:$0xff]
  %v413 = vld [vmem:[#allocation2 + $0x118] sm:$0xff]
  %v414 = vld [vmem:[#allocation2 + $0x120] sm:$0xff]
  %v415 = vld [vmem:[#allocation2 + $0x128] sm:$0xff]
  %v416 = vld [vmem:[#allocation2 + $0x130] sm:$0xff]
  %v417 = vld [vmem:[#allocation2 + $0x138] sm:$0xff]
  %v418 = vld [vmem:[#allocation2 + $0x140] sm:$0xff]
  %v419 = vld [vmem:[#allocation2 + $0x148] sm:$0xff]
  %v420 = vld [vmem:[#allocation2 + $0x150] sm:$0xff]
  %v421 = vld [vmem:[#allocation2 + $0x158] sm:$0xff]
  %v422 = vld [vmem:[#allocation2 + $0x160] sm:$0xff]
  %vm423 = vcmask 588800
  %v425 = vsel %vm423, %v377, 0
  %427 = vmatprep.subr.mxu0 %v379
  %428 = vmatpush1.msra.mxu0 %v378
  %429 = vmatprep.subr.mxu0 %v384
  %430 = vmatpush1.msra.mxu0 %v383
  %431 = vmatprep.subr.mxu0 %v389
  %432 = vmatpush1.msra.mxu0 %v388
  %433 = vmatprep.subr.mxu0 %v394
  %434 = vmatpush1.msra.mxu0 %v393
  %435 = vmatprep.subr.mxu0 %v399
  %436 = vmatpush1.msra.mxu0 %v398
  %437 = vmatprep.subr.mxu0 %v404
  %438 = vmatpush1.msra.mxu0 %v403
  %439 = vmatprep.subr.mxu0 %v409
  %440 = vmatpush1.msra.mxu0 %v408
  %441 = vmatprep.subr.mxu0 %v414
  %442 = vmatpush1.msra.mxu0 %v413
  %443 = vmatprep.subr.mxu0 %v419
  %444 = vmatpush1.msra.mxu0 %v418
  %445 = vmatprep.subr.mxu0 0.0
  %446 = vmatpush1.msra.mxu0 0.0
  %447 = vmatprep.subr.mxu0 0.0
  %448 = vmatpush1.msra.mxu0 0.0
  %449 = vmatprep.subr.mxu0 0.0
  %450 = vmatpush1.msra.mxu0 0.0
  %451 = vmatprep.subr.mxu0 0.0
  %452 = vmatpush1.msra.mxu0 0.0
  %453 = vmatprep.subr.mxu0 0.0
  %454 = vmatpush1.msra.mxu0 0.0
  %455 = vmatprep.subr.mxu0 0.0
  %456 = vmatpush1.msra.mxu0 0.0
  %457 = vmatprep.subr.mxu0 0.0
  %458 = vmatpush1.msra.mxu0 0.0
  %459 = vmatprep.subr.mxu0 0.0
  %460 = vmatpush1.msra.mxu0 0.0
  %461 = vmatprep.subr.mxu0 0.0
  %462 = vmatpush1.msra.mxu0 0.0
  %463 = vmatprep.subr.mxu0 0.0
  %464 = vmatpush1.msra.mxu0 0.0
  %465 = vmatprep.subr.mxu0 0.0
  %466 = vmatpush1.msra.mxu0 0.0
  %467 = vmatprep.subr.mxu0 0.0
  %468 = vmatpush1.msra.mxu0 0.0
  %469 = vmatprep.subr.mxu0 0.0
  %470 = vmatpush1.msra.mxu0 0.0
  %471 = vmatprep.subr.mxu0 0.0
  %472 = vmatpush1.msra.mxu0 0.0
  %473 = vmatprep.subr.mxu0 0.0
  %474 = vmatpush1.msra.mxu0 0.0
  %475 = vmatprep.subr.mxu0 0.0
  %476 = vmatpush1.msra.mxu0 0.0
  %477 = vmatprep.subr.mxu0 0.0
  %478 = vmatpush1.msra.mxu0 0.0
  %479 = vmatprep.subr.mxu0 0.0
  %480 = vmatpush1.msra.mxu0 0.0
  %481 = vmatprep.subr.mxu0 0.0
  %482 = vmatpush1.msra.mxu0 0.0
  %483 = vmatprep.subr.mxu0 0.0
  %484 = vmatpush1.msra.mxu0 0.0
  %485 = vmatprep.subr.mxu0 0.0
  %486 = vmatpush1.msra.mxu0 0.0
  %487 = vmatprep.subr.mxu0 0.0
  %488 = vmatpush1.msra.mxu0 0.0
  %489 = vmatprep.subr.mxu0 0.0
  %490 = vmatpush1.msra.mxu0 0.0
  %491 = vmatprep.mubr.f32.mxu0 0.0
  %492 = vmatmul.mubr.f32.gmra.mrb[0].mxu0 %v425
  %v493 = vpop.f32.mrb[0].mxu0
  %v494 = vadd.f32 0.0, %v493
  %v495 = vpop.f32.mrb[0].mxu0
  %v496 = vadd.f32 0.0, %v495
  %497 = vdwg.mxu0
  %498 = vmatprep.subr.mxu0 %v381
  %499 = vmatpush1.msra.mxu0 %v380
  %500 = vmatprep.subr.mxu0 %v386
  %501 = vmatpush1.msra.mxu0 %v385
  %502 = vmatprep.subr.mxu0 %v391
  %503 = vmatpush1.msra.mxu0 %v390
  %504 = vmatprep.subr.mxu0 %v396
  %505 = vmatpush1.msra.mxu0 %v395
  %506 = vmatprep.subr.mxu0 %v401
  %507 = vmatpush1.msra.mxu0 %v400
  %508 = vmatprep.subr.mxu0 %v406
  %509 = vmatpush1.msra.mxu0 %v405
  %510 = vmatprep.subr.mxu0 %v411
  %511 = vmatpush1.msra.mxu0 %v410
  %512 = vmatprep.subr.mxu0 %v416
  %513 = vmatpush1.msra.mxu0 %v415
  %514 = vmatprep.subr.mxu0 %v421
  %515 = vmatpush1.msra.mxu0 %v420
  %516 = vmatprep.subr.mxu0 0.0
  %517 = vmatpush1.msra.mxu0 0.0
  %518 = vmatprep.subr.mxu0 0.0
  %519 = vmatpush1.msra.mxu0 0.0
  %520 = vmatprep.subr.mxu0 0.0
  %521 = vmatpush1.msra.mxu0 0.0
  %522 = vmatprep.subr.mxu0 0.0
  %523 = vmatpush1.msra.mxu0 0.0
  %524 = vmatprep.subr.mxu0 0.0
  %525 = vmatpush1.msra.mxu0 0.0
  %526 = vmatprep.subr.mxu0 0.0
  %527 = vmatpush1.msra.mxu0 0.0
  %528 = vmatprep.subr.mxu0 0.0
  %529 = vmatpush1.msra.mxu0 0.0
  %530 = vmatprep.subr.mxu0 0.0
  %531 = vmatpush1.msra.mxu0 0.0
  %532 = vmatprep.subr.mxu0 0.0
  %533 = vmatpush1.msra.mxu0 0.0
  %534 = vmatprep.subr.mxu0 0.0
  %535 = vmatpush1.msra.mxu0 0.0
  %536 = vmatprep.subr.mxu0 0.0
  %537 = vmatpush1.msra.mxu0 0.0
  %538 = vmatprep.subr.mxu0 0.0
  %539 = vmatpush1.msra.mxu0 0.0
  %540 = vmatprep.subr.mxu0 0.0
  %541 = vmatpush1.msra.mxu0 0.0
  %542 = vmatprep.subr.mxu0 0.0
  %543 = vmatpush1.msra.mxu0 0.0
  %544 = vmatprep.subr.mxu0 0.0
  %545 = vmatpush1.msra.mxu0 0.0
  %546 = vmatprep.subr.mxu0 0.0
  %547 = vmatpush1.msra.mxu0 0.0
  %548 = vmatprep.subr.mxu0 0.0
  %549 = vmatpush1.msra.mxu0 0.0
  %550 = vmatprep.subr.mxu0 0.0
  %551 = vmatpush1.msra.mxu0 0.0
  %552 = vmatprep.subr.mxu0 0.0
  %553 = vmatpush1.msra.mxu0 0.0
  %554 = vmatprep.subr.mxu0 0.0
  %555 = vmatpush1.msra.mxu0 0.0
  %556 = vmatprep.subr.mxu0 0.0
  %557 = vmatpush1.msra.mxu0 0.0
  %558 = vmatprep.subr.mxu0 0.0
  %559 = vmatpush1.msra.mxu0 0.0
  %560 = vmatprep.subr.mxu0 0.0
  %561 = vmatpush1.msra.mxu0 0.0
  %562 = vmatprep.mubr.f32.mxu0 0.0
  %563 = vmatmul.mubr.f32.gmra.mrb[0].mxu0 %v425
  %v564 = vpop.f32.mrb[0].mxu0
  %v565 = vadd.f32 0.0, %v564
  %v566 = vpop.f32.mrb[0].mxu0
  %v567 = vadd.f32 0.0, %v566
  %568 = vdwg.mxu0
  %569 = vmatprep.subr.mxu0 0.0
  %570 = vmatpush1.msra.mxu0 %v382
  %571 = vmatprep.subr.mxu0 0.0
  %572 = vmatpush1.msra.mxu0 %v387
  %573 = vmatprep.subr.mxu0 0.0
  %574 = vmatpush1.msra.mxu0 %v392
  %575 = vmatprep.subr.mxu0 0.0
  %576 = vmatpush1.msra.mxu0 %v397
  %577 = vmatprep.subr.mxu0 0.0
  %578 = vmatpush1.msra.mxu0 %v402
  %579 = vmatprep.subr.mxu0 0.0
  %580 = vmatpush1.msra.mxu0 %v407
  %581 = vmatprep.subr.mxu0 0.0
  %582 = vmatpush1.msra.mxu0 %v412
  %583 = vmatprep.subr.mxu0 0.0
  %584 = vmatpush1.msra.mxu0 %v417
  %585 = vmatprep.subr.mxu0 0.0
  %586 = vmatpush1.msra.mxu0 %v422
  %587 = vmatprep.subr.mxu0 0.0
  %588 = vmatpush1.msra.mxu0 0.0
  %589 = vmatprep.subr.mxu0 0.0
  %590 = vmatpush1.msra.mxu0 0.0
  %591 = vmatprep.subr.mxu0 0.0
  %592 = vmatpush1.msra.mxu0 0.0
  %593 = vmatprep.subr.mxu0 0.0
  %594 = vmatpush1.msra.mxu0 0.0
  %595 = vmatprep.subr.mxu0 0.0
  %596 = vmatpush1.msra.mxu0 0.0
  %597 = vmatprep.subr.mxu0 0.0
  %598 = vmatpush1.msra.mxu0 0.0
  %599 = vmatprep.subr.mxu0 0.0
  %600 = vmatpush1.msra.mxu0 0.0
  %601 = vmatprep.subr.mxu0 0.0
  %602 = vmatpush1.msra.mxu0 0.0
  %603 = vmatprep.subr.mxu0 0.0
  %604 = vmatpush1.msra.mxu0 0.0
  %605 = vmatprep.subr.mxu0 0.0
  %606 = vmatpush1.msra.mxu0 0.0
  %607 = vmatprep.subr.mxu0 0.0
  %608 = vmatpush1.msra.mxu0 0.0
  %609 = vmatprep.subr.mxu0 0.0
  %610 = vmatpush1.msra.mxu0 0.0
  %611 = vmatprep.subr.mxu0 0.0
  %612 = vmatpush1.msra.mxu0 0.0
  %613 = vmatprep.subr.mxu0 0.0
  %614 = vmatpush1.msra.mxu0 0.0
  %615 = vmatprep.subr.mxu0 0.0
  %616 = vmatpush1.msra.mxu0 0.0
  %617 = vmatprep.subr.mxu0 0.0
  %618 = vmatpush1.msra.mxu0 0.0
  %619 = vmatprep.subr.mxu0 0.0
  %620 = vmatpush1.msra.mxu0 0.0
  %621 = vmatprep.subr.mxu0 0.0
  %622 = vmatpush1.msra.mxu0 0.0
  %623 = vmatprep.subr.mxu0 0.0
  %624 = vmatpush1.msra.mxu0 0.0
  %625 = vmatprep.subr.mxu0 0.0
  %626 = vmatpush1.msra.mxu0 0.0
  %627 = vmatprep.subr.mxu0 0.0
  %628 = vmatpush1.msra.mxu0 0.0
  %629 = vmatprep.subr.mxu0 0.0
  %630 = vmatpush1.msra.mxu0 0.0
  %631 = vmatprep.subr.mxu0 0.0
  %632 = vmatpush1.msra.mxu0 0.0
  %633 = vmatprep.mubr.f32.mxu0 0.0
  %634 = vmatmul.mubr.f32.gmra.mrb[0].mxu0 %v425
  %v635 = vpop.f32.mrb[0].mxu0
  %v636 = vadd.f32 0.0, %v635
  %v637 = vpop.f32.mrb[0].mxu0
  %638 = vdwg.mxu0
  %v639 = vmax.f32 %v494, 0.0
  %v640 = vmax.f32 %v496, 0.0
  %v641 = vmax.f32 %v565, 0.0
  %v642 = vmax.f32 %v567, 0.0
  %v643 = vmax.f32 %v636, 0.0
  %645 = vrot.lane.b32.xlu0 %v639, 127
  %v646 = vpop.permute.xlu0 %645
  %vm648 = vcmask 130048
  %649 = vst.msk [vmem:[%s2] sm:$0xff] %vm648, %v646
  %650 = vrot.lane.b32.xlu0 %v639, 125
  %v651 = vpop.permute.xlu0 %650
  %vm653 = vcmask 261248
  %654 = vst.msk [vmem:[%s2] sm:$0xff] %vm653, %v651
  %655 = vrot.lane.b32.xlu0 %v639, 123
  %v656 = vpop.permute.xlu0 %655
  %vm658 = vcmask 392448
  %659 = vst.msk [vmem:[%s2] sm:$0xff] %vm658, %v656
  %660 = vrot.lane.b32.xlu0 %v639, 121
  %v661 = vpop.permute.xlu0 %660
  %vm663 = vcmask 523648
  %664 = vst.msk [vmem:[%s2] sm:$0xff] %vm663, %v661
  %665 = vrot.lane.b32.xlu0 %v639, 119
  %v666 = vpop.permute.xlu0 %665
  %vm668 = vcmask 654848
  %669 = vst.msk [vmem:[%s2] sm:$0xff] %vm668, %v666
  %670 = vrot.lane.b32.xlu0 %v639, 117
  %v671 = vpop.permute.xlu0 %670
  %vm673 = vcmask 786048
  %674 = vst.msk [vmem:[%s2] sm:$0xff] %vm673, %v671
  %675 = vrot.lane.b32.xlu0 %v639, 115
  %v676 = vpop.permute.xlu0 %675
  %vm678 = vcmask 917248
  %679 = vst.msk [vmem:[%s2] sm:$0xff] %vm678, %v676
  %681 = vrot.lane.b32.xlu0 %v639, 113
  %v682 = vpop.permute.xlu0 %681
  %683 = vrot.lane.b32.xlu0 %v640, 113
  %v684 = vpop.permute.xlu0 %683
  %vm685 = vcmask 924672
  %v686 = vsel %vm685, %v682, %v684
  %vm688 = vcmask 1048448
  %689 = vst.msk [vmem:[%s2] sm:$0xff] %vm688, %v686
  %690 = vrot.lane.b32.xlu0 %v640, 111
  %v691 = vpop.permute.xlu0 %690
  %693 = vst.msk [vmem:[%s2 + $0x8] sm:$0xff] %vm648, %v691
  %694 = vrot.lane.b32.xlu0 %v640, 109
  %v695 = vpop.permute.xlu0 %694
  %697 = vst.msk [vmem:[%s2 + $0x8] sm:$0xff] %vm653, %v695
  %698 = vrot.lane.b32.xlu0 %v640, 107
  %v699 = vpop.permute.xlu0 %698
  %701 = vst.msk [vmem:[%s2 + $0x8] sm:$0xff] %vm658, %v699
  %702 = vrot.lane.b32.xlu0 %v640, 105
  %v703 = vpop.permute.xlu0 %702
  %705 = vst.msk [vmem:[%s2 + $0x8] sm:$0xff] %vm663, %v703
  %706 = vrot.lane.b32.xlu0 %v640, 103
  %v707 = vpop.permute.xlu0 %706
  %709 = vst.msk [vmem:[%s2 + $0x8] sm:$0xff] %vm668, %v707
  %710 = vrot.lane.b32.xlu0 %v640, 101
  %v711 = vpop.permute.xlu0 %710
  %713 = vst.msk [vmem:[%s2 + $0x8] sm:$0xff] %vm673, %v711
  %715 = vrot.lane.b32.xlu0 %v640, 99
  %v716 = vpop.permute.xlu0 %715
  %717 = vrot.lane.b32.xlu0 %v641, 99
  %v718 = vpop.permute.xlu0 %717
  %vm719 = vcmask 809984
  %v720 = vsel %vm719, %v716, %v718
  %722 = vst.msk [vmem:[%s2 + $0x8] sm:$0xff] %vm678, %v720
  %723 = vrot.lane.b32.xlu0 %v641, 97
  %v724 = vpop.permute.xlu0 %723
  %726 = vst.msk [vmem:[%s2 + $0x8] sm:$0xff] %vm688, %v724
  %727 = vrot.lane.b32.xlu0 %v641, 95
  %v728 = vpop.permute.xlu0 %727
  %s730 = scalar_lea.vmem %s2, 16
  %731 = vst.msk [vmem:[%s730] sm:$0xff] %vm648, %v728
  %732 = vrot.lane.b32.xlu0 %v641, 93
  %v733 = vpop.permute.xlu0 %732
  %735 = vst.msk [vmem:[%s730] sm:$0xff] %vm653, %v733
  %736 = vrot.lane.b32.xlu0 %v641, 91
  %v737 = vpop.permute.xlu0 %736
  %739 = vst.msk [vmem:[%s730] sm:$0xff] %vm658, %v737
  %740 = vrot.lane.b32.xlu0 %v641, 89
  %v741 = vpop.permute.xlu0 %740
  %743 = vst.msk [vmem:[%s730] sm:$0xff] %vm663, %v741
  %744 = vrot.lane.b32.xlu0 %v641, 87
  %v745 = vpop.permute.xlu0 %744
  %747 = vst.msk [vmem:[%s730] sm:$0xff] %vm668, %v745
  %749 = vrot.lane.b32.xlu0 %v641, 85
  %v750 = vpop.permute.xlu0 %749
  %751 = vrot.lane.b32.xlu0 %v642, 85
  %v752 = vpop.permute.xlu0 %751
  %vm753 = vcmask 695296
  %v754 = vsel %vm753, %v750, %v752
  %756 = vst.msk [vmem:[%s730] sm:$0xff] %vm673, %v754
  %757 = vrot.lane.b32.xlu0 %v642, 83
  %v758 = vpop.permute.xlu0 %757
  %760 = vst.msk [vmem:[%s730] sm:$0xff] %vm678, %v758
  %761 = vrot.lane.b32.xlu0 %v642, 81
  %v762 = vpop.permute.xlu0 %761
  %764 = vst.msk [vmem:[%s730] sm:$0xff] %vm688, %v762
  %765 = vrot.lane.b32.xlu0 %v642, 79
  %v766 = vpop.permute.xlu0 %765
  %768 = vst.msk [vmem:[%s730 + $0x8] sm:$0xff] %vm648, %v766
  %769 = vrot.lane.b32.xlu0 %v642, 77
  %v770 = vpop.permute.xlu0 %769
  %772 = vst.msk [vmem:[%s730 + $0x8] sm:$0xff] %vm653, %v770
  %773 = vrot.lane.b32.xlu0 %v642, 75
  %v774 = vpop.permute.xlu0 %773
  %776 = vst.msk [vmem:[%s730 + $0x8] sm:$0xff] %vm658, %v774
  %777 = vrot.lane.b32.xlu0 %v642, 73
  %v778 = vpop.permute.xlu0 %777
  %780 = vst.msk [vmem:[%s730 + $0x8] sm:$0xff] %vm663, %v778
  %782 = vrot.lane.b32.xlu0 %v642, 71
  %v783 = vpop.permute.xlu0 %782
  %784 = vrot.lane.b32.xlu0 %v643, 71
  %v785 = vpop.permute.xlu0 %784
  %vm786 = vcmask 580608
  %v787 = vsel %vm786, %v783, %v785
  %789 = vst.msk [vmem:[%s730 + $0x8] sm:$0xff] %vm668, %v787
  %790 = vrot.lane.b32.xlu0 %v643, 69
  %v791 = vpop.permute.xlu0 %790
  %793 = vst.msk [vmem:[%s730 + $0x8] sm:$0xff] %vm673, %v791
  %794 = vrot.lane.b32.xlu0 %v643, 67
  %v795 = vpop.permute.xlu0 %794
  %797 = vst.msk [vmem:[%s730 + $0x8] sm:$0xff] %vm678, %v795
  %798 = vrot.lane.b32.xlu0 %v643, 65
  %v799 = vpop.permute.xlu0 %798
  %801 = vst.msk [vmem:[%s730 + $0x8] sm:$0xff] %vm688, %v799
  // Predicated region
  $region10: #{binblock_forward.1} parent=0 // pred_check
    _
  $region11: #{binblock_forward.1} parent=0 // pred_check_branch
    %803 = sbr.rel (0) target = $region13
  $region12: #{binblock_forward.1} parent=0 // pred_region
    _
  $region13: #{binblock_forward.1} parent=0 // pred_fallthru
    _
  // Predicated region
  $region14: #{binblock_forward.1} parent=0 // pred_check
    _
  $region15: #{binblock_forward.1} parent=0 // pred_check_branch
    %805 = sbr.rel (0) target = $region17
  $region16: #{binblock_forward.1} parent=0 // pred_region
    _
  $region17: #{binblock_forward.1} parent=0 // pred_fallthru
    _

</llo_original>
